<compile_context>
chip_gen: v6e
topology: v6e:2x2x1
jax: 0.10.0
libtpu: 0.0.40
codegen_flags: <defaults>
</compile_context>

<pallas_src>
import functools

import jax
import jax.numpy as jnp
from jax import lax
from jax.experimental import pallas as pl
from jax.experimental.pallas import tpu as pltpu


def _instance_discri_kernel(
    x_rows_ref,      # (tm, D)  row tile of x
    x_full_ref,      # (N, D)   full x (constant index map -> fetched once)
    lab_col_ref,     # (tm, 1)  labels for this row tile
    lab_row_ref,     # (1, N)   all labels (row vector)
    out_ref,         # (1, 1)   final loss
    pos_acc,         # (1, 1)   VMEM scratch: sum of positive-pair hinges
    neg_acc,         # (1, 1)   VMEM scratch: sum of negative-pair hinges
    n1_acc,          # (1, 1)   VMEM scratch: count of positive pairs
    *, m0, m1, n, tm,
):
    step = pl.program_id(0)

    @pl.when(step == 0)
    def _init():
        pos_acc[...] = jnp.zeros_like(pos_acc)
        neg_acc[...] = jnp.zeros_like(neg_acc)
        n1_acc[...] = jnp.zeros_like(n1_acc)

    xr = x_rows_ref[...].astype(jnp.float32)                      # (tm, D)
    xf = x_full_ref[...].astype(jnp.float32)                      # (N, D)

    # F.normalize(x, dim=1): x / clamp(||x||, 1e-12) == x * rsqrt(max(||x||^2, 1e-24))
    r_ss = jnp.sum(xr * xr, axis=1, keepdims=True)                # (tm, 1)
    xr_n = xr * lax.rsqrt(jnp.maximum(r_ss, 1e-24))
    f_ss = jnp.sum(xf * xf, axis=1, keepdims=True)                # (N, 1)
    xf_n = xf * lax.rsqrt(jnp.maximum(f_ss, 1e-24))

    # Gram block on the MXU: g[i, j] = <xn_i, xn_j>, bf16 inputs, f32 accumulation.
    g = lax.dot_general(
        xr_n.astype(jnp.bfloat16), xf_n.astype(jnp.bfloat16),
        dimension_numbers=(((1,), (1,)), ((), ())),               # A @ B^T, no transpose
        preferred_element_type=jnp.float32,
    )                                                             # (tm, N)

    # ||xi - xj||^2 = 2 - 2 g ; clamp at 0 so rounding that pushes the diagonal of g
    # slightly above 1 cannot produce NaN under the sqrt.
    dsq = jnp.maximum(2.0 - 2.0 * g, 0.0)
    dx = jnp.sqrt(dsq + 1e-09)                                    # (tm, N)

    # Row validity mask guards the (possibly padded / garbage) tail of the last tile.
    row_ids = step * tm + lax.broadcasted_iota(jnp.int32, (tm, 1), 0)
    valid = row_ids < n                                           # (tm, 1)

    same = lab_col_ref[...] == lab_row_ref[...]                   # (tm, N) bool
    pos_mask = jnp.logical_and(same, valid)
    neg_mask = jnp.logical_and(jnp.logical_not(same), valid)

    # jnp.where (not mask-multiply) so NaNs from padded rows are cleanly discarded.
    pos_acc[...] += jnp.sum(jnp.where(pos_mask, jnp.maximum(dx - m0, 0.0), 0.0),
                            keepdims=True)
    neg_acc[...] += jnp.sum(jnp.where(neg_mask, jnp.maximum(m1 - dx, 0.0), 0.0),
                            keepdims=True)
    n1_acc[...] += jnp.sum(pos_mask.astype(jnp.float32), keepdims=True)

    @pl.when(step == pl.num_programs(0) - 1)
    def _finalize():
        n1 = n1_acc[...]
        n2 = float(n * n) - n1                                    # valid pairs total = N^2
        n1 = jnp.where(n1 == 0.0, 1.0, n1)
        n2 = jnp.where(n2 == 0.0, 1.0, n2)
        out_ref[...] = pos_acc[...] / n1 + neg_acc[...] / n2


@functools.partial(jax.jit, static_argnames=("m0", "m1"))
def instance_discri_loss(x, labels, *, m0=0.5, m1=1.5):
    """Pallas implementation of InstanceDiscriLoss.forward(x, labels)."""
    n, d = x.shape
    lab_col = labels.reshape(n, 1).astype(jnp.int32)
    lab_row = labels.reshape(1, n).astype(jnp.int32)

    # Single block for small N; 256-row tiles (sublane-aligned) for large N so VMEM only
    # holds a (256, N) slab of the pairwise matrix per step.
    tm = n if n <= 512 else 256
    grid = (pl.cdiv(n, tm),)

    kernel = functools.partial(
        _instance_discri_kernel, m0=float(m0), m1=float(m1), n=n, tm=tm)

    xf32 = x.astype(jnp.float32)
    out = pl.pallas_call(
        kernel,
        out_shape=jax.ShapeDtypeStruct((1, 1), jnp.float32),
        grid=grid,
        in_specs=[
            pl.BlockSpec((tm, d), lambda i: (i, 0)),   # row tile of x
            pl.BlockSpec((n, d), lambda i: (0, 0)),    # full x (columns), fetched once
            pl.BlockSpec((tm, 1), lambda i: (i, 0)),   # labels column tile
            pl.BlockSpec((1, n), lambda i: (0, 0)),    # labels row, fetched once
        ],
        out_specs=pl.BlockSpec((1, 1), lambda i: (0, 0)),
        scratch_shapes=[pltpu.VMEM((1, 1), jnp.float32)] * 3,
        compiler_params=pltpu.CompilerParams(dimension_semantics=("arbitrary",)),
    )(xf32, xf32, lab_col, lab_row)
    return out[0, 0]


def _reference_loss(x, labels, m0, m1):
    """Pure-JAX (f32) reference mirroring the PyTorch module exactly."""
    xn = x / jnp.maximum(jnp.linalg.norm(x, axis=1, keepdims=True), 1e-12)
    diff = xn[:, None, :] - xn[None, :, :]
    dx = jnp.sqrt(jnp.sum(diff * diff, axis=2) + 1e-09)
    mask = (labels[:, None] == labels[None, :]).astype(jnp.float32)
    mask_op = 1.0 - mask
    n1 = jnp.sum(mask)
    n1 = jnp.where(n1 == 0.0, 1.0, n1)
    n2 = jnp.sum(mask_op)
    n2 = jnp.where(n2 == 0.0, 1.0, n2)
    loss1 = jnp.sum(mask * jnp.maximum(dx - m0, 0.0)) / n1
    loss2 = jnp.sum(mask_op * jnp.maximum(m1 - dx, 0.0)) / n2
    return loss1 + loss2


if __name__ == "__main__":
    key = jax.random.PRNGKey(0)
    kx, kl = jax.random.split(key)

    # Small shapes consistent with the module's test code (x: (batch, hidden), y: (batch,)).
    N, D = 8, 32
    x = jax.random.normal(kx, (N, D), dtype=jnp.float32)
    labels = jax.random.randint(kl, (N,), 0, 3, dtype=jnp.int32)

    # "configs" hyperparameters (not learned weights) — fixed deterministically.
    m0, m1 = 0.5, 1.5

    loss = instance_discri_loss(x, labels, m0=m0, m1=m1)
    loss = jax.block_until_ready(loss)

    expected = _reference_loss(x.astype(jnp.float32), labels, m0, m1)
    # The bf16 Gram matmul (f32 accumulation) bounds accuracy to ~1e-3 relative on an
    # O(1) hinge loss, so compare against the exact-f32 module reference at 1e-2.
    assert jnp.allclose(loss, expected, atol=1e-2, rtol=1e-2), (loss, expected)

    print("KERNEL_OK")
</pallas_src>

<mosaic_0001>
module attributes {stable_mosaic.version = 11 : i64} {
  func.func @_instance_discri_kernel(%arg0: i32, %arg1: memref<8x32xf32, #tpu.memory_space<vmem>>, %arg2: memref<8x32xf32, #tpu.memory_space<vmem>>, %arg3: memref<8x1xi32, #tpu.memory_space<vmem>>, %arg4: memref<1x8xi32, #tpu.memory_space<vmem>>, %arg5: memref<1x1xf32, #tpu.memory_space<vmem>>, %arg6: memref<1x1xf32, #tpu.memory_space<vmem>>, %arg7: memref<1x1xf32, #tpu.memory_space<vmem>>, %arg8: memref<1x1xf32, #tpu.memory_space<vmem>>) attributes {dimension_semantics = [#tpu.dimension_semantics<arbitrary>], iteration_bounds = array<i64: 1>, scalar_prefetch = 0 : i64, scratch_operands = 3 : i64, tpu.core_type = #tpu.core_type<tc>, window_params = [{transform_indices = @transform_0, window_bounds = array<i64: 8, 32>}, {pipeline_mode = #tpu.pipeline_mode<synchronous>, transform_indices = @transform_1, window_bounds = array<i64: 8, 32>}, {transform_indices = @transform_2, window_bounds = array<i64: 8, 1>}, {pipeline_mode = #tpu.pipeline_mode<synchronous>, transform_indices = @transform_3, window_bounds = array<i64: 1, 8>}, {pipeline_mode = #tpu.pipeline_mode<synchronous>, transform_indices = @transform_4, window_bounds = array<i64: 1, 1>}]} {
    %c0_i32 = arith.constant 0 : i32
    %0 = arith.cmpi eq, %arg0, %c0_i32 : i32
    %1 = arith.extui %0 : i1 to i32
    %c0_i32_0 = arith.constant 0 : i32
    %2 = arith.cmpi ne, %1, %c0_i32_0 : i32
    scf.if %2 {
      %cst_41 = arith.constant 0.000000e+00 : f32
      %90 = vector.broadcast %cst_41 : f32 to vector<1x1xf32>
      %c0_42 = arith.constant 0 : index
      %c0_43 = arith.constant 0 : index
      %91 = vector.load %arg6[%c0_42, %c0_43] : memref<1x1xf32, #tpu.memory_space<vmem>>, vector<1x1xf32>
      tpu.vector_store %arg6[%c0_42, %c0_43], %90 {strides = array<i32>} : memref<1x1xf32, #tpu.memory_space<vmem>>, vector<1x1xf32>,
      %cst_44 = arith.constant 0.000000e+00 : f32
      %92 = vector.broadcast %cst_44 : f32 to vector<1x1xf32>
      %c0_45 = arith.constant 0 : index
      %c0_46 = arith.constant 0 : index
      %93 = vector.load %arg7[%c0_45, %c0_46] : memref<1x1xf32, #tpu.memory_space<vmem>>, vector<1x1xf32>
      tpu.vector_store %arg7[%c0_45, %c0_46], %92 {strides = array<i32>} : memref<1x1xf32, #tpu.memory_space<vmem>>, vector<1x1xf32>,
      %cst_47 = arith.constant 0.000000e+00 : f32
      %94 = vector.broadcast %cst_47 : f32 to vector<1x1xf32>
      %c0_48 = arith.constant 0 : index
      %c0_49 = arith.constant 0 : index
      %95 = vector.load %arg8[%c0_48, %c0_49] : memref<1x1xf32, #tpu.memory_space<vmem>>, vector<1x1xf32>
      tpu.vector_store %arg8[%c0_48, %c0_49], %94 {strides = array<i32>} : memref<1x1xf32, #tpu.memory_space<vmem>>, vector<1x1xf32>,
    } else {
    }
    %c0 = arith.constant 0 : index
    %c0_1 = arith.constant 0 : index
    %3 = vector.load %arg1[%c0, %c0_1] : memref<8x32xf32, #tpu.memory_space<vmem>>, vector<8x32xf32>
    %c0_2 = arith.constant 0 : index
    %c0_3 = arith.constant 0 : index
    %4 = vector.load %arg2[%c0_2, %c0_3] : memref<8x32xf32, #tpu.memory_space<vmem>>, vector<8x32xf32>
    %5 = arith.mulf %3, %3 : vector<8x32xf32>
    %cst = arith.constant dense<0.000000e+00> : vector<8xf32>
    %6 = vector.multi_reduction <add>, %5, %cst [1] : vector<8x32xf32> to vector<8xf32>
    %7 = vector.shape_cast %6 : vector<8xf32> to vector<8x1xf32>
    %cst_4 = arith.constant 1.000000e-24 : f32
    %8 = vector.broadcast %cst_4 : f32 to vector<8x1xf32>
    %9 = arith.maximumf %7, %8 : vector<8x1xf32>
    %10 = math.rsqrt %9 : vector<8x1xf32>
    %11 = vector.broadcast %10 : vector<8x1xf32> to vector<8x32xf32>
    %12 = arith.mulf %3, %11 : vector<8x32xf32>
    %13 = arith.mulf %4, %4 : vector<8x32xf32>
    %cst_5 = arith.constant dense<0.000000e+00> : vector<8xf32>
    %14 = vector.multi_reduction <add>, %13, %cst_5 [1] : vector<8x32xf32> to vector<8xf32>
    %15 = vector.shape_cast %14 : vector<8xf32> to vector<8x1xf32>
    %cst_6 = arith.constant 1.000000e-24 : f32
    %16 = vector.broadcast %cst_6 : f32 to vector<8x1xf32>
    %17 = arith.maximumf %15, %16 : vector<8x1xf32>
    %18 = math.rsqrt %17 : vector<8x1xf32>
    %19 = vector.broadcast %18 : vector<8x1xf32> to vector<8x32xf32>
    %20 = arith.mulf %4, %19 : vector<8x32xf32>
    %21 = arith.truncf %12 : vector<8x32xf32> to vector<8x32xbf16>
    %22 = arith.truncf %20 : vector<8x32xf32> to vector<8x32xbf16>
    %cst_7 = arith.constant dense<0.000000e+00> : vector<8x8xf32>
    %23 = tpu.matmul %21, %22, %cst_7 {dimension_numbers = #tpu.dot_dimension_numbers<[1], [1], [0], [0], [0, 0, 1, 0], [], []>} : vector<8x32xbf16>, vector<8x32xbf16>, vector<8x8xf32> -> vector<8x8xf32>
    %cst_8 = arith.constant 2.000000e+00 : f32
    %24 = vector.broadcast %cst_8 : f32 to vector<8x8xf32>
    %25 = arith.mulf %24, %23 : vector<8x8xf32>
    %cst_9 = arith.constant 2.000000e+00 : f32
    %26 = vector.broadcast %cst_9 : f32 to vector<8x8xf32>
    %27 = arith.subf %26, %25 : vector<8x8xf32>
    %cst_10 = arith.constant 0.000000e+00 : f32
    %28 = vector.broadcast %cst_10 : f32 to vector<8x8xf32>
    %29 = arith.maximumf %27, %28 : vector<8x8xf32>
    %cst_11 = arith.constant 9.99999971E-10 : f32
    %30 = vector.broadcast %cst_11 : f32 to vector<8x8xf32>
    %31 = arith.addf %29, %30 : vector<8x8xf32>
    %32 = math.sqrt %31 : vector<8x8xf32>
    %c8_i32 = arith.constant 8 : i32
    %33 = arith.muli %arg0, %c8_i32 : i32
    %34 = tpu.iota {dimensions = array<i32: 0>} : vector<8x1xi32>
    %35 = vector.broadcast %33 : i32 to vector<8x1xi32>
    %36 = arith.addi %35, %34 : vector<8x1xi32>
    %c8_i32_12 = arith.constant 8 : i32
    %37 = vector.broadcast %c8_i32_12 : i32 to vector<8x1xi32>
    %38 = arith.cmpi slt, %36, %37 : vector<8x1xi32>
    %c0_13 = arith.constant 0 : index
    %c0_14 = arith.constant 0 : index
    %39 = vector.load %arg3[%c0_13, %c0_14] : memref<8x1xi32, #tpu.memory_space<vmem>>, vector<8x1xi32>
    %c0_15 = arith.constant 0 : index
    %c0_16 = arith.constant 0 : index
    %40 = vector.load %arg4[%c0_15, %c0_16] : memref<1x8xi32, #tpu.memory_space<vmem>>, vector<1x8xi32>
    %41 = vector.broadcast %39 : vector<8x1xi32> to vector<8x8xi32>
    %42 = vector.broadcast %40 : vector<1x8xi32> to vector<8x8xi32>
    %43 = arith.cmpi eq, %41, %42 : vector<8x8xi32>
    %44 = vector.broadcast %38 : vector<8x1xi1> to vector<8x8xi1>
    %45 = arith.andi %43, %44 : vector<8x8xi1>
    %cst_17 = arith.constant dense<true> : vector<8x8xi1>
    %46 = arith.xori %43, %cst_17 : vector<8x8xi1>
    %47 = vector.broadcast %38 : vector<8x1xi1> to vector<8x8xi1>
    %48 = arith.andi %46, %47 : vector<8x8xi1>
    %c0_18 = arith.constant 0 : index
    %c0_19 = arith.constant 0 : index
    %49 = vector.load %arg6[%c0_18, %c0_19] : memref<1x1xf32, #tpu.memory_space<vmem>>, vector<1x1xf32>
    %cst_20 = arith.constant 5.000000e-01 : f32
    %50 = vector.broadcast %cst_20 : f32 to vector<8x8xf32>
    %51 = arith.subf %32, %50 : vector<8x8xf32>
    %cst_21 = arith.constant 0.000000e+00 : f32
    %52 = vector.broadcast %cst_21 : f32 to vector<8x8xf32>
    %53 = arith.maximumf %51, %52 : vector<8x8xf32>
    %cst_22 = arith.constant 0.000000e+00 : f32
    %54 = vector.broadcast %cst_22 : f32 to vector<8x8xf32>
    %55 = arith.select %45, %53, %54 : vector<8x8xi1>, vector<8x8xf32>
    %56 = vector.shape_cast %55 : vector<8x8xf32> to vector<1x8x8xf32>
    %cst_23 = arith.constant dense<0.000000e+00> : vector<1xf32>
    %57 = vector.multi_reduction <add>, %56, %cst_23 [1, 2] : vector<1x8x8xf32> to vector<1xf32>
    %58 = vector.shape_cast %57 : vector<1xf32> to vector<1x1x1xf32>
    %59 = vector.extract %58[0, 0, 0] : f32 from vector<1x1x1xf32>
    %60 = vector.broadcast %59 : f32 to vector<1x1xf32>
    %61 = arith.addf %49, %60 : vector<1x1xf32>
    %c0_24 = arith.constant 0 : index
    %c0_25 = arith.constant 0 : index
    %62 = vector.load %arg6[%c0_24, %c0_25] : memref<1x1xf32, #tpu.memory_space<vmem>>, vector<1x1xf32>
    tpu.vector_store %arg6[%c0_24, %c0_25], %61 {strides = array<i32>} : memref<1x1xf32, #tpu.memory_space<vmem>>, vector<1x1xf32>,
    %c0_26 = arith.constant 0 : index
    %c0_27 = arith.constant 0 : index
    %63 = vector.load %arg7[%c0_26, %c0_27] : memref<1x1xf32, #tpu.memory_space<vmem>>, vector<1x1xf32>
    %cst_28 = arith.constant 1.500000e+00 : f32
    %64 = vector.broadcast %cst_28 : f32 to vector<8x8xf32>
    %65 = arith.subf %64, %32 : vector<8x8xf32>
    %cst_29 = arith.constant 0.000000e+00 : f32
    %66 = vector.broadcast %cst_29 : f32 to vector<8x8xf32>
    %67 = arith.maximumf %65, %66 : vector<8x8xf32>
    %cst_30 = arith.constant 0.000000e+00 : f32
    %68 = vector.broadcast %cst_30 : f32 to vector<8x8xf32>
    %69 = arith.select %48, %67, %68 : vector<8x8xi1>, vector<8x8xf32>
    %70 = vector.shape_cast %69 : vector<8x8xf32> to vector<1x8x8xf32>
    %cst_31 = arith.constant dense<0.000000e+00> : vector<1xf32>
    %71 = vector.multi_reduction <add>, %70, %cst_31 [1, 2] : vector<1x8x8xf32> to vector<1xf32>
    %72 = vector.shape_cast %71 : vector<1xf32> to vector<1x1x1xf32>
    %73 = vector.extract %72[0, 0, 0] : f32 from vector<1x1x1xf32>
    %74 = vector.broadcast %73 : f32 to vector<1x1xf32>
    %75 = arith.addf %63, %74 : vector<1x1xf32>
    %c0_32 = arith.constant 0 : index
    %c0_33 = arith.constant 0 : index
    %76 = vector.load %arg7[%c0_32, %c0_33] : memref<1x1xf32, #tpu.memory_space<vmem>>, vector<1x1xf32>
    tpu.vector_store %arg7[%c0_32, %c0_33], %75 {strides = array<i32>} : memref<1x1xf32, #tpu.memory_space<vmem>>, vector<1x1xf32>,
    %c0_34 = arith.constant 0 : index
    %c0_35 = arith.constant 0 : index
    %77 = vector.load %arg8[%c0_34, %c0_35] : memref<1x1xf32, #tpu.memory_space<vmem>>, vector<1x1xf32>
    %78 = arith.extui %45 : vector<8x8xi1> to vector<8x8xi32>
    %79 = arith.sitofp %78 : vector<8x8xi32> to vector<8x8xf32>
    %80 = vector.shape_cast %79 : vector<8x8xf32> to vector<1x8x8xf32>
    %cst_36 = arith.constant dense<0.000000e+00> : vector<1xf32>
    %81 = vector.multi_reduction <add>, %80, %cst_36 [1, 2] : vector<1x8x8xf32> to vector<1xf32>
    %82 = vector.shape_cast %81 : vector<1xf32> to vector<1x1x1xf32>
    %83 = vector.extract %82[0, 0, 0] : f32 from vector<1x1x1xf32>
    %84 = vector.broadcast %83 : f32 to vector<1x1xf32>
    %85 = arith.addf %77, %84 : vector<1x1xf32>
    %c0_37 = arith.constant 0 : index
    %c0_38 = arith.constant 0 : index
    %86 = vector.load %arg8[%c0_37, %c0_38] : memref<1x1xf32, #tpu.memory_space<vmem>>, vector<1x1xf32>
    tpu.vector_store %arg8[%c0_37, %c0_38], %85 {strides = array<i32>} : memref<1x1xf32, #tpu.memory_space<vmem>>, vector<1x1xf32>,
    %c0_i32_39 = arith.constant 0 : i32
    %87 = arith.cmpi eq, %arg0, %c0_i32_39 : i32
    %88 = arith.extui %87 : i1 to i32
    %c0_i32_40 = arith.constant 0 : i32
    %89 = arith.cmpi ne, %88, %c0_i32_40 : i32
    scf.if %89 {
      %c0_41 = arith.constant 0 : index
      %c0_42 = arith.constant 0 : index
      %90 = vector.load %arg8[%c0_41, %c0_42] : memref<1x1xf32, #tpu.memory_space<vmem>>, vector<1x1xf32>
      %cst_43 = arith.constant 6.400000e+01 : f32
      %91 = vector.broadcast %cst_43 : f32 to vector<1x1xf32>
      %92 = arith.subf %91, %90 : vector<1x1xf32>
      %cst_44 = arith.constant 0.000000e+00 : f32
      %93 = vector.broadcast %cst_44 : f32 to vector<1x1xf32>
      %94 = arith.cmpf oeq, %90, %93 : vector<1x1xf32>
      %cst_45 = arith.constant 1.000000e+00 : f32
      %95 = vector.broadcast %cst_45 : f32 to vector<1x1xf32>
      %96 = arith.select %94, %95, %90 : vector<1x1xi1>, vector<1x1xf32>
      %cst_46 = arith.constant 0.000000e+00 : f32
      %97 = vector.broadcast %cst_46 : f32 to vector<1x1xf32>
      %98 = arith.cmpf oeq, %92, %97 : vector<1x1xf32>
      %cst_47 = arith.constant 1.000000e+00 : f32
      %99 = vector.broadcast %cst_47 : f32 to vector<1x1xf32>
      %100 = arith.select %98, %99, %92 : vector<1x1xi1>, vector<1x1xf32>
      %c0_48 = arith.constant 0 : index
      %c0_49 = arith.constant 0 : index
      %101 = vector.load %arg6[%c0_48, %c0_49] : memref<1x1xf32, #tpu.memory_space<vmem>>, vector<1x1xf32>
      %102 = arith.divf %101, %96 : vector<1x1xf32>
      %c0_50 = arith.constant 0 : index
      %c0_51 = arith.constant 0 : index
      %103 = vector.load %arg7[%c0_50, %c0_51] : memref<1x1xf32, #tpu.memory_space<vmem>>, vector<1x1xf32>
      %104 = arith.divf %103, %100 : vector<1x1xf32>
      %105 = arith.addf %102, %104 : vector<1x1xf32>
      %c0_52 = arith.constant 0 : index
      %c0_53 = arith.constant 0 : index
      %106 = vector.load %arg5[%c0_52, %c0_53] : memref<1x1xf32, #tpu.memory_space<vmem>>, vector<1x1xf32>
      tpu.vector_store %arg5[%c0_52, %c0_53], %105 {strides = array<i32>} : memref<1x1xf32, #tpu.memory_space<vmem>>, vector<1x1xf32>,
    } else {
    }
    return
  }
  func.func @transform_0(%arg0: i32) -> (i32, i32) {
    %c0_i32 = arith.constant 0 : i32
    %c0_i32_0 = arith.constant 0 : i32
    return %arg0, %c0_i32 : i32, i32
  }
  func.func @transform_1(%arg0: i32) -> (i32, i32) {
    %c0_i32 = arith.constant 0 : i32
    %c0_i32_0 = arith.constant 0 : i32
    %c0_i32_1 = arith.constant 0 : i32
    return %c0_i32, %c0_i32_0 : i32, i32
  }
  func.func @transform_2(%arg0: i32) -> (i32, i32) {
    %c0_i32 = arith.constant 0 : i32
    %c0_i32_0 = arith.constant 0 : i32
    return %arg0, %c0_i32 : i32, i32
  }
  func.func @transform_3(%arg0: i32) -> (i32, i32) {
    %c0_i32 = arith.constant 0 : i32
    %c0_i32_0 = arith.constant 0 : i32
    %c0_i32_1 = arith.constant 0 : i32
    return %c0_i32, %c0_i32_0 : i32, i32
  }
  func.func @transform_4(%arg0: i32) -> (i32, i32) {
    %c0_i32 = arith.constant 0 : i32
    %c0_i32_0 = arith.constant 0 : i32
    %c0_i32_1 = arith.constant 0 : i32
    return %c0_i32, %c0_i32_0 : i32, i32
  }
}

</mosaic_0001>

<llo_original>
// kernel: instance_discri_loss.1
$region0: #{instance_discri_loss.1}
  #allocation0 [shape = 'u32[]', space=smem, size = 0x4, offset = 0x4, fixed_abs, tag = 'smem constant byte address 0x4 - core index']
  #allocation1 [shape = 'u32[144,128]{1,0:T(1,128)}', space=vmem, size = 0x12000, scoped, tag = 'internal scratch']
  #allocation2 [shape = 'f32[1,1]{1,0:T(1,128)}', space=vmem, size = 0x200, scoped, tag = 'scratch operand']
  #allocation3 [shape = 'f32[1,1]{1,0:T(1,128)}', space=vmem, size = 0x200, scoped, tag = 'scratch operand']
  #allocation4 [shape = 'f32[1,1]{1,0:T(1,128)}', space=vmem, size = 0x200, scoped, tag = 'scratch operand']
  %s0 = inlined_call_operand.vmem [shape: f32[8,32], index: 0, kind: input, shape index: {}, may-alias: {0,1}]
  %s1 = inlined_call_operand.vmem [shape: f32[8,32], index: 1, kind: input, shape index: {}, may-alias: {0,1}]
  %s2 = inlined_call_operand.vmem [shape: s32[8,1], index: 2, kind: input, shape index: {}]
  %s3 = inlined_call_operand.vmem [shape: s32[1,8], index: 3, kind: input, shape index: {}]
  %s4 = inlined_call_operand.hbm [shape: f32[1,1], index: 4, kind: output, shape index: {}]
  %s5 = sld [smem:[#allocation0]]
  $region34: #{instance_discri_loss.1} parent=0
    _
  %s7 = ssub.s32 1, %s5
  %s8 = scalar_select 0, %s7, %s5
  $region1: #{instance_discri_loss.1} parent=0
    #allocation5 [shape = 'u8[512]{0}', space=vmem, size = 0x400, scoped, tag = 'output window, operand 0, single buffered']
    #allocation6 [shape = 's32[1]{0}', space=sflag, size = 0x4, scoped, tag = 'scoped memory for instance_discri_loss.1']
    %9 = vsyncpa [#allocation6], 0
    // Predicated region
    $region2: #{instance_discri_loss.1} parent=1 // pred_check
      _
    $region3: #{instance_discri_loss.1} parent=1 // pred_check_branch
      %11 = sbr.rel (0) target = $region5
    $region4: #{instance_discri_loss.1} parent=1 // pred_region
      _
    $region5: #{instance_discri_loss.1} parent=1 // pred_fallthru
      _
    // Predicated region
    $region6: #{instance_discri_loss.1} parent=1 // pred_check
      _
    $region7: #{instance_discri_loss.1} parent=1 // pred_check_branch
      %13 = sbr.rel (0) target = $region9
    $region8: #{instance_discri_loss.1} parent=1 // pred_region
      _
    $region9: #{instance_discri_loss.1} parent=1 // pred_fallthru
      _
    // Predicated region
    $region10: #{instance_discri_loss.1} parent=1 // pred_check
      _
    $region11: #{instance_discri_loss.1} parent=1 // pred_check_branch
      %15 = sbr.rel (0) target = $region13
    $region12: #{instance_discri_loss.1} parent=1 // pred_region
      _
    $region13: #{instance_discri_loss.1} parent=1 // pred_fallthru
      _
    // Predicated region
    $region14: #{instance_discri_loss.1} parent=1 // pred_check
      _
    $region15: #{instance_discri_loss.1} parent=1 // pred_check_branch
      %17 = sbr.rel (0) target = $region17
    $region16: #{instance_discri_loss.1} parent=1 // pred_region
      _
    $region17: #{instance_discri_loss.1} parent=1 // pred_fallthru
      _
    %p19 = scmp.eq.s32.totalorder 0, 0
    // Predicated region
    $region18: #{instance_discri_loss.1} parent=1 // pred_check
      %p20 = pneg %p19
    $region19: #{instance_discri_loss.1} parent=1 // pred_check_branch
      %22 = sbr.rel (%p20) target = $region21
    $region20: #{instance_discri_loss.1} parent=1 // pred_region
      %vm23 = vcmask 0
      %24 = vst.msk [vmem:[#allocation2] sm:$0x1] %vm23, 0.0
      %25 = vst.msk [vmem:[#allocation3] sm:$0x1] %vm23, 0.0
      %26 = vst.msk [vmem:[#allocation4] sm:$0x1] %vm23, 0.0
    $region21: #{instance_discri_loss.1} parent=1 // pred_fallthru
      _
    %v27 = vld [vmem:[%s0] sm:$0xff]
    %v28 = vld [vmem:[%s1] sm:$0xff]
    %v29 = vmul.f32 %v27, %v27
    %vm30 = vcmask 261120
    %v31 = vsel %vm30, %v29, 0.0
    %32 = vadd.xlane.f32.xlu0 %v31
    %v33 = vpop.xlane.xlu0 %32
    %v34 = vmax.f32 %v33, 1e-24
    %v35 = vrsqrt.pop %v34
    %v36 = vmul.f32 %v27, %v35
    %v37 = vmul.f32 %v28, %v28
    %v38 = vsel %vm30, %v37, 0.0
    %39 = vadd.xlane.f32.xlu0 %v38
    %v40 = vpop.xlane.xlu0 %39
    %v41 = vmax.f32 %v40, 1e-24
    %v42 = vrsqrt.pop %v41
    %v43 = vmul.f32 %v28, %v42
    %v44 = vpack.c.bf16 %v36, %v36
    %v45 = vpack.c.bf16 %v43, %v43
    %v47 = vsel %vm30, %v44, 0
    %v50 = vsel %vm30, %v45, 0
    %52 = vmatprep.subr.bf16.mxu0 0
    %53 = vmatpush1.bf16.xpose.msra.mxu0 0
    %54 = vmatprep.subr.bf16.mxu0 0
    %55 = vmatpush1.bf16.xpose.msra.mxu0 0
    %56 = vmatprep.subr.bf16.mxu0 0
    %57 = vmatpush1.bf16.xpose.msra.mxu0 0
    %58 = vmatprep.subr.bf16.mxu0 0
    %59 = vmatpush1.bf16.xpose.msra.mxu0 0
    %60 = vmatprep.subr.bf16.mxu0 0
    %61 = vmatpush1.bf16.xpose.msra.mxu0 0
    %62 = vmatprep.subr.bf16.mxu0 0
    %63 = vmatpush1.bf16.xpose.msra.mxu0 0
    %64 = vmatprep.subr.bf16.mxu0 0
    %65 = vmatpush1.bf16.xpose.msra.mxu0 0
    %66 = vmatprep.subr.bf16.mxu0 0
    %67 = vmatpush1.bf16.xpose.msra.mxu0 %v50
    %68 = vmatprep.subr.bf16.mxu0 0
    %69 = vmatpush2.bf16.xpose.msra.mxu0 0
    %70 = vmatprep.subr.bf16.mxu0 0
    %71 = vmatpush2.bf16.xpose.msra.mxu0 0
    %72 = vmatprep.subr.bf16.mxu0 0
    %73 = vmatpush2.bf16.xpose.msra.mxu0 0
    %74 = vmatprep.subr.bf16.mxu0 0
    %75 = vmatpush2.bf16.xpose.msra.mxu0 0
    %76 = vmatprep.subr.bf16.mxu0 0
    %77 = vmatpush2.bf16.xpose.msra.mxu0 0
    %78 = vmatprep.subr.bf16.mxu0 0
    %79 = vmatpush2.bf16.xpose.msra.mxu0 0
    %80 = vmatprep.subr.bf16.mxu0 0
    %81 = vmatpush2.bf16.xpose.msra.mxu0 0
    %82 = vmatprep.subr.bf16.mxu0 0
    %83 = vmatpush2.bf16.xpose.msra.mxu0 0
    %84 = vmatprep.mubr.bf16.mxu0 0
    %85 = vmatmul.mubr.bf16.gmra.mxu0 %v47
    %v86 = vpop.f32.mrf.mxu0
    %v87 = vadd.f32 0.0, %v86
    %v88 = vpop.f32.mrf.mxu0
    %v89 = vpop.f32.mrf.mxu0
    %v90 = vpop.f32.mrf.mxu0
    %91 = vdwg.mxu0
    %v92 = vmul.f32 %v87, 2.0
    %v93 = vsub.f32 2.0, %v92
    %v94 = vmax.f32 %v93, 0.0
    %v95 = vadd.f32 %v94, 1e-09
    %v96 = vrsqrt.pop %v95
    %v97 = vmul.f32 %v95, %v96
    %vm98 = vcmp.eq.f32.partialorder %v95, inf
    %v99 = vsel %vm98, %v95, %v97
    %vm100 = vcmp.eq.f32.partialorder %v95, 0.0
    %v101 = vand.u32 %v95, 2147483648
    %v102 = vsel %vm100, %v101, %v99
    %s103 = smul.u32 0, 8
    %v104 = vlaneseq
    %v105 = vshrl.u32 %v104, 7
    %v106 = vstv %s103
    %v107 = vadd.s32 %v106, %v105
    %vm108 = vcmp.lt.s32.totalorder %v107, 8
    %v109 = vld [vmem:[%s2] sm:$0xff]
    %v110 = vld [vmem:[%s3] sm:$0x1]
    %111 = vset.pattern.permute.xlu0 0
    %112 = vperm.xlu0 %111, %v109
    %v113 = vpop.permute.xlu0 %112
    %v114 = vlaneseq
    %v115 = vshrl.u32 %v114, 7
    %v116 = vsub.s32 0, %v115
    %v117 = vrot.slane %v110, %v116
    %vm118 = vcmp.eq.s32.totalorder %v113, %v117
    %v119 = vsel %vm108, 1, 0
    %vm120 = vcmp.eq.s32.totalorder %v119, 1
    %vm121 = vmand %vm118, %vm120
    %vm122 = vmxor %vm118, 1
    %vm123 = vmand %vm122, %vm120
    %v124 = vld [vmem:[#allocation2] sm:$0x1]
    %v125 = vsub.f32 %v102, 0.5
    %v126 = vmax.f32 %v125, 0.0
    %v127 = vsel %vm121, %v126, 0.0
    %vm128 = vcmask 64512
    %v129 = vsel %vm128, %v127, 0.0
    %130 = vadd.xlane.f32.xlu0 %v129
    %v131 = vpop.xlane.xlu0 %130
    %v132 = vrot.slane %v131, 4
    %v133 = vadd.f32 %v131, %v132
    %v134 = vrot.slane %v133, 2
    %v135 = vadd.f32 %v133, %v134
    %v136 = vrot.slane %v135, 1
    %v137 = vadd.f32 %v135, %v136
    %s138 = vtos %v137
    %v139 = vstv %s138
    %v140 = vadd.f32 %v124, %v139
    %vm141 = vcmask 0
    %142 = vst.msk [vmem:[#allocation2] sm:$0x1] %vm141, %v140
    %v143 = vld [vmem:[#allocation3] sm:$0x1]
    %v144 = vsub.f32 1.5, %v102
    %v145 = vmax.f32 %v144, 0.0
    %v146 = vsel %vm123, %v145, 0.0
    %v147 = vsel %vm128, %v146, 0.0
    %148 = vadd.xlane.f32.xlu0 %v147
    %v149 = vpop.xlane.xlu0 %148
    %v150 = vrot.slane %v149, 4
    %v151 = vadd.f32 %v149, %v150
    %v152 = vrot.slane %v151, 2
    %v153 = vadd.f32 %v151, %v152
    %v154 = vrot.slane %v153, 1
    %v155 = vadd.f32 %v153, %v154
    %s156 = vtos %v155
    %v157 = vstv %s156
    %v158 = vadd.f32 %v143, %v157
    %159 = vst.msk [vmem:[#allocation3] sm:$0x1] %vm141, %v158
    %v160 = vld [vmem:[#allocation4] sm:$0x1]
    %v161 = vsel %vm121, 1, 0
    %v162 = vcvt.s32.f32 %v161
    %v163 = vsel %vm128, %v162, 0.0
    %164 = vadd.xlane.f32.xlu0 %v163
    %v165 = vpop.xlane.xlu0 %164
    %v166 = vrot.slane %v165, 4
    %v167 = vadd.f32 %v165, %v166
    %v168 = vrot.slane %v167, 2
    %v169 = vadd.f32 %v167, %v168
    %v170 = vrot.slane %v169, 1
    %v171 = vadd.f32 %v169, %v170
    %s172 = vtos %v171
    %v173 = vstv %s172
    %v174 = vadd.f32 %v160, %v173
    %175 = vst.msk [vmem:[#allocation4] sm:$0x1] %vm141, %v174
    // Predicated region
    $region22: #{instance_discri_loss.1} parent=1 // pred_check
      %p176 = pneg %p19
    $region23: #{instance_discri_loss.1} parent=1 // pred_check_branch
      %178 = sbr.rel (%p176) target = $region25
    $region24: #{instance_discri_loss.1} parent=1 // pred_region
      %v179 = vld [vmem:[#allocation4] sm:$0x1]
      %v180 = vsub.f32 64.0, %v179
      %vm181 = vcmp.eq.f32.partialorder %v179, 0.0
      %v182 = vsel %vm181, 1.0, %v179
      %vm183 = vcmp.eq.f32.partialorder %v180, 0.0
      %v184 = vsel %vm183, 1.0, %v180
      %v185 = vld [vmem:[#allocation2] sm:$0x1]
      %v186 = vrcp.pop %v182
      %v187 = vmul.f32 %v185, %v186
      %v188 = vld [vmem:[#allocation3] sm:$0x1]
      %v189 = vrcp.pop %v184
      %v190 = vmul.f32 %v188, %v189
      %v191 = vadd.f32 %v187, %v190
      %192 = vst.msk [vmem:[#allocation5] sm:$0x1] %vm141, %v191
    $region25: #{instance_discri_loss.1} parent=1 // pred_fallthru
      _
    // Predicated region
    $region26: #{instance_discri_loss.1} parent=1 // pred_check
      _
    $region27: #{instance_discri_loss.1} parent=1 // pred_check_branch
      %194 = sbr.rel (0) target = $region29
    $region28: #{instance_discri_loss.1} parent=1 // pred_region
      %s196 = ssub.s32 16, 16
      %197 = vsyncadd [#allocation6], %s196
      %s199 = sshll.u32 [#allocation5], 4
      %s200 = int_to_ptr.vmem [resolvable:$true] %s199
      %202 = dma.vmem_to_hbm [thread:$0]  %s200, 16, %s4, [#allocation6]
    $region29: #{instance_discri_loss.1} parent=1 // pred_fallthru
      _
    // Predicated region
    $region30: #{instance_discri_loss.1} parent=1 // pred_check
      _
    $region31: #{instance_discri_loss.1} parent=1 // pred_check_branch
      %204 = sbr.rel (0) target = $region33
    $region32: #{instance_discri_loss.1} parent=1 // pred_region
      %205 = dma.done [#allocation6], 16
    $region33: #{instance_discri_loss.1} parent=1 // pred_fallthru
      _
    %206 = vsyncpa [#allocation6], 1

</llo_original>
